<compile_context>
chip_gen: v5e
topology: v5e:2x2
jax: 0.10.0
libtpu: 0.0.40
codegen_flags: <defaults>
</compile_context>

<pallas_src>
import jax
import jax.numpy as jnp
from jax.experimental import pallas as pl
from jax.experimental.pallas import tpu as pltpu


def mlp_kernel(x_ref,
               w1c_ref, b1_ref,
               w2_ref, b2_ref,
               w3_ref, b3_ref,
               w4_ref, b4_ref,
               o_ref):
    """Fused 4-layer MLP (Linear+ReLU x3, Linear) on one feature-major tile.

    x_ref:   (6,  T)  f32   activations, batch on lanes
    w1c_ref: (6, 32, 1) f32 layer-1 weight columns (w1[:, k] as (32, 1))
    w2_ref:  (64, 32) bf16, w3_ref: (32, 64) bf16, w4_ref: (22, 32) bf16
    b*_ref:  (out, 1) f32   biases broadcast over the batch lanes
    o_ref:   (22, T)  f32
    """
    x = x_ref[...]                       # (6, T) f32
    T = x.shape[1]
    n1 = b1_ref.shape[0]                 # 32

    # ---- Layer 1 (K=6): VPU broadcast-FMA.  A K=6 contraction would occupy
    # only 6/128 of the MXU systolic depth; push/drain costs more than the
    # math, and the VPU slots are otherwise idle here.
    h = jnp.broadcast_to(b1_ref[...], (n1, T)).astype(jnp.float32)
    for k in range(x.shape[0]):          # static unroll over the 6 inputs
        h = h + w1c_ref[k] * x[k:k + 1, :]   # (32,1)*(1,T) -> (32,T)
    h = jnp.maximum(h, 0.0)

    # ---- Layers 2..4 on the MXU: bf16 operands, f32 accumulation; bias-add
    # and ReLU stay in f32 (no bf16 VPU path on v5e).
    h = jnp.dot(w2_ref[...], h.astype(jnp.bfloat16),
                preferred_element_type=jnp.float32) + b2_ref[...]
    h = jnp.maximum(h, 0.0)

    h = jnp.dot(w3_ref[...], h.astype(jnp.bfloat16),
                preferred_element_type=jnp.float32) + b3_ref[...]
    h = jnp.maximum(h, 0.0)

    z = jnp.dot(w4_ref[...], h.astype(jnp.bfloat16),
                preferred_element_type=jnp.float32) + b4_ref[...]
    o_ref[...] = z.astype(o_ref.dtype)


def net_forward(x, params, *, tile_b=512):
    """x: [B, 6] float32 -> [B, 22] float32 (matches torch Net.forward)."""
    (w1, b1), (w2, b2), (w3, b3), (w4, b4) = params
    B, Din = x.shape
    assert Din == w1.shape[1] == 6
    Dout = w4.shape[0]

    # Batch tile selection: small batches run as one full-dim block (always a
    # legal block shape); large batches use a big 128-aligned tile so every
    # lane is dense and per-grid-step overhead (~0.35us) is amortized, while
    # still leaving >=2 grid steps so both v7x TensorCores get work.
    # VMEM is a non-issue at these sizes (weights ~20 KB, activations < 1 MB
    # per buffer even at tile_b=1024, well under v7x's 64 MiB).
    if B <= tile_b:
        tile = B
        Bp = B
    else:
        assert tile_b % 128 == 0, "batch tile must be a multiple of 128"
        tile = tile_b
        Bp = pl.cdiv(B, tile) * tile

    # Feature-major activations: [6, Bp], batch on the lane axis.
    xt = x.astype(jnp.float32).T
    if Bp != B:
        xt = jnp.pad(xt, ((0, 0), (0, Bp - B)))

    # Biases as (out, 1) columns -> broadcast over the batch lanes in VMEM.
    b1c, b2c, b3c, b4c = (b.reshape(-1, 1).astype(jnp.float32)
                          for b in (b1, b2, b3, b4))
    # Layer-1 weight columns: w1cols[k] == w1[:, k] as a (32, 1) tile (VPU path).
    w1cols = w1.astype(jnp.float32).T.reshape(Din, w1.shape[0], 1)
    # bf16 MXU operands for layers 2..4.
    w2b, w3b, w4b = (w.astype(jnp.bfloat16) for w in (w2, w3, w4))

    def replicated(arr):
        nd = arr.ndim
        # Full-array block, constant index_map: stays resident across the
        # grid, no per-step re-DMA of the (tiny) weights/biases.
        return pl.BlockSpec(arr.shape, lambda *i: (0,) * nd)

    out_t = pl.pallas_call(
        mlp_kernel,
        out_shape=jax.ShapeDtypeStruct((Dout, Bp), jnp.float32),
        grid_spec=pltpu.PrefetchScalarGridSpec(
            num_scalar_prefetch=0,
            grid=(Bp // tile,),
            in_specs=[
                pl.BlockSpec((Din, tile), lambda i: (0, i)),
                replicated(w1cols), replicated(b1c),
                replicated(w2b), replicated(b2c),
                replicated(w3b), replicated(b3c),
                replicated(w4b), replicated(b4c),
            ],
            out_specs=pl.BlockSpec((Dout, tile), lambda i: (0, i)),
        ),
        compiler_params=pltpu.CompilerParams(
            dimension_semantics=("parallel",)),
    )(xt, w1cols, b1c, w2b, b2c, w3b, b3c, w4b, b4c)

    # Cheap wrapper transpose back to the PyTorch-style [B, 22] output.
    return out_t[:, :B].T


def init_params(key):
    """Deterministic init mimicking torch.nn.Linear (uniform +-1/sqrt(fan_in)).

    Weights stored in torch layout [out_features, in_features].
    """
    sizes = [(6, 32), (32, 64), (64, 32), (32, 22)]
    params = []
    for fan_in, fan_out in sizes:
        key, kw, kb = jax.random.split(key, 3)
        bound = 1.0 / jnp.sqrt(jnp.float32(fan_in))
        w = jax.random.uniform(kw, (fan_out, fan_in), jnp.float32, -bound, bound)
        b = jax.random.uniform(kb, (fan_out,), jnp.float32, -bound, bound)
        params.append((w, b))
    return params


def net_forward_ref(x, params):
    """Plain-JAX f32 reference for correctness checking."""
    (w1, b1), (w2, b2), (w3, b3), (w4, b4) = params
    h = jax.nn.relu(x @ w1.T + b1)
    h = jax.nn.relu(h @ w2.T + b2)
    h = jax.nn.relu(h @ w3.T + b3)
    return h @ w4.T + b4


if __name__ == "__main__":
    # TODO(synk): the original script loads 'planti.csv' via pandas; replaced
    # with deterministic random inputs since file I/O is out of scope.
    key = jax.random.PRNGKey(0)
    k_x, k_p = jax.random.split(key)
    params = init_params(k_p)

    # Small demo batch: whole batch in a single grid step / single block.
    B = 16
    x = jax.random.normal(k_x, (B, 6), jnp.float32)
    z = jax.block_until_ready(net_forward(x, params))
    z_ref = net_forward_ref(x, params)
    assert z.shape == (B, 22)
    # bf16 MXU operands loosen bit-level parity vs the f32 reference.
    assert jnp.allclose(z, z_ref, atol=5e-2, rtol=5e-2), "mismatch (B=16)"

    # Also exercise the tiled / padded multi-step path (128-wide lane tiles).
    B2 = 300
    x2 = jax.random.normal(k_x, (B2, 6), jnp.float32)
    z2 = jax.block_until_ready(net_forward(x2, params, tile_b=128))
    z2_ref = net_forward_ref(x2, params)
    assert z2.shape == (B2, 22)
    assert jnp.allclose(z2, z2_ref, atol=5e-2, rtol=5e-2), "mismatch (B=300)"

    print("KERNEL_OK")
</pallas_src>

<mosaic_0001>
module attributes {stable_mosaic.version = 11 : i64} {
  func.func @mlp_kernel(%arg0: i32, %arg1: memref<6x16xf32, #tpu.memory_space<vmem>>, %arg2: memref<6x32x1xf32, #tpu.memory_space<vmem>>, %arg3: memref<32x1xf32, #tpu.memory_space<vmem>>, %arg4: memref<64x32xbf16, #tpu.memory_space<vmem>>, %arg5: memref<64x1xf32, #tpu.memory_space<vmem>>, %arg6: memref<32x64xbf16, #tpu.memory_space<vmem>>, %arg7: memref<32x1xf32, #tpu.memory_space<vmem>>, %arg8: memref<22x32xbf16, #tpu.memory_space<vmem>>, %arg9: memref<22x1xf32, #tpu.memory_space<vmem>>, %arg10: memref<22x16xf32, #tpu.memory_space<vmem>>) attributes {dimension_semantics = [#tpu.dimension_semantics<parallel>], iteration_bounds = array<i64: 1>, scalar_prefetch = 0 : i64, scratch_operands = 0 : i64, tpu.core_type = #tpu.core_type<tc>, window_params = [{transform_indices = @transform_0, window_bounds = array<i64: 6, 16>}, {pipeline_mode = #tpu.pipeline_mode<synchronous>, transform_indices = @transform_1, window_bounds = array<i64: 6, 32, 1>}, {pipeline_mode = #tpu.pipeline_mode<synchronous>, transform_indices = @transform_2, window_bounds = array<i64: 32, 1>}, {pipeline_mode = #tpu.pipeline_mode<synchronous>, transform_indices = @transform_3, window_bounds = array<i64: 64, 32>}, {pipeline_mode = #tpu.pipeline_mode<synchronous>, transform_indices = @transform_4, window_bounds = array<i64: 64, 1>}, {pipeline_mode = #tpu.pipeline_mode<synchronous>, transform_indices = @transform_5, window_bounds = array<i64: 32, 64>}, {pipeline_mode = #tpu.pipeline_mode<synchronous>, transform_indices = @transform_6, window_bounds = array<i64: 32, 1>}, {pipeline_mode = #tpu.pipeline_mode<synchronous>, transform_indices = @transform_7, window_bounds = array<i64: 22, 32>}, {pipeline_mode = #tpu.pipeline_mode<synchronous>, transform_indices = @transform_8, window_bounds = array<i64: 22, 1>}, {transform_indices = @transform_9, window_bounds = array<i64: 22, 16>}]} {
    %c0 = arith.constant 0 : index
    %c0_0 = arith.constant 0 : index
    %0 = vector.load %arg1[%c0, %c0_0] : memref<6x16xf32, #tpu.memory_space<vmem>>, vector<6x16xf32>
    %c0_1 = arith.constant 0 : index
    %c0_2 = arith.constant 0 : index
    %1 = vector.load %arg3[%c0_1, %c0_2] : memref<32x1xf32, #tpu.memory_space<vmem>>, vector<32x1xf32>
    %2 = vector.shape_cast %1 : vector<32x1xf32> to vector<32x1xf32>
    %3 = vector.broadcast %2 : vector<32x1xf32> to vector<32x16xf32>
    %c0_3 = arith.constant 0 : index
    %c0_4 = arith.constant 0 : index
    %c0_5 = arith.constant 0 : index
    %4 = vector.load %arg2[%c0_3, %c0_4, %c0_5] : memref<6x32x1xf32, #tpu.memory_space<vmem>>, vector<1x32x1xf32>
    %5 = vector.shape_cast %4 : vector<1x32x1xf32> to vector<32x1xf32>
    %6 = vector.extract_strided_slice %0 {offsets = [0, 0], sizes = [1, 16], strides = [1, 1]} : vector<6x16xf32> to vector<1x16xf32>
    %7 = vector.broadcast %5 : vector<32x1xf32> to vector<32x16xf32>
    %8 = vector.broadcast %6 : vector<1x16xf32> to vector<32x16xf32>
    %9 = arith.mulf %7, %8 : vector<32x16xf32>
    %10 = arith.addf %3, %9 : vector<32x16xf32>
    %c1 = arith.constant 1 : index
    %c0_6 = arith.constant 0 : index
    %c0_7 = arith.constant 0 : index
    %11 = vector.load %arg2[%c1, %c0_6, %c0_7] : memref<6x32x1xf32, #tpu.memory_space<vmem>>, vector<1x32x1xf32>
    %12 = vector.shape_cast %11 : vector<1x32x1xf32> to vector<32x1xf32>
    %13 = vector.extract_strided_slice %0 {offsets = [1, 0], sizes = [1, 16], strides = [1, 1]} : vector<6x16xf32> to vector<1x16xf32>
    %14 = vector.broadcast %12 : vector<32x1xf32> to vector<32x16xf32>
    %15 = vector.broadcast %13 : vector<1x16xf32> to vector<32x16xf32>
    %16 = arith.mulf %14, %15 : vector<32x16xf32>
    %17 = arith.addf %10, %16 : vector<32x16xf32>
    %c2 = arith.constant 2 : index
    %c0_8 = arith.constant 0 : index
    %c0_9 = arith.constant 0 : index
    %18 = vector.load %arg2[%c2, %c0_8, %c0_9] : memref<6x32x1xf32, #tpu.memory_space<vmem>>, vector<1x32x1xf32>
    %19 = vector.shape_cast %18 : vector<1x32x1xf32> to vector<32x1xf32>
    %20 = vector.extract_strided_slice %0 {offsets = [2, 0], sizes = [1, 16], strides = [1, 1]} : vector<6x16xf32> to vector<1x16xf32>
    %21 = vector.broadcast %19 : vector<32x1xf32> to vector<32x16xf32>
    %22 = vector.broadcast %20 : vector<1x16xf32> to vector<32x16xf32>
    %23 = arith.mulf %21, %22 : vector<32x16xf32>
    %24 = arith.addf %17, %23 : vector<32x16xf32>
    %c3 = arith.constant 3 : index
    %c0_10 = arith.constant 0 : index
    %c0_11 = arith.constant 0 : index
    %25 = vector.load %arg2[%c3, %c0_10, %c0_11] : memref<6x32x1xf32, #tpu.memory_space<vmem>>, vector<1x32x1xf32>
    %26 = vector.shape_cast %25 : vector<1x32x1xf32> to vector<32x1xf32>
    %27 = vector.extract_strided_slice %0 {offsets = [3, 0], sizes = [1, 16], strides = [1, 1]} : vector<6x16xf32> to vector<1x16xf32>
    %28 = vector.broadcast %26 : vector<32x1xf32> to vector<32x16xf32>
    %29 = vector.broadcast %27 : vector<1x16xf32> to vector<32x16xf32>
    %30 = arith.mulf %28, %29 : vector<32x16xf32>
    %31 = arith.addf %24, %30 : vector<32x16xf32>
    %c4 = arith.constant 4 : index
    %c0_12 = arith.constant 0 : index
    %c0_13 = arith.constant 0 : index
    %32 = vector.load %arg2[%c4, %c0_12, %c0_13] : memref<6x32x1xf32, #tpu.memory_space<vmem>>, vector<1x32x1xf32>
    %33 = vector.shape_cast %32 : vector<1x32x1xf32> to vector<32x1xf32>
    %34 = vector.extract_strided_slice %0 {offsets = [4, 0], sizes = [1, 16], strides = [1, 1]} : vector<6x16xf32> to vector<1x16xf32>
    %35 = vector.broadcast %33 : vector<32x1xf32> to vector<32x16xf32>
    %36 = vector.broadcast %34 : vector<1x16xf32> to vector<32x16xf32>
    %37 = arith.mulf %35, %36 : vector<32x16xf32>
    %38 = arith.addf %31, %37 : vector<32x16xf32>
    %c5 = arith.constant 5 : index
    %c0_14 = arith.constant 0 : index
    %c0_15 = arith.constant 0 : index
    %39 = vector.load %arg2[%c5, %c0_14, %c0_15] : memref<6x32x1xf32, #tpu.memory_space<vmem>>, vector<1x32x1xf32>
    %40 = vector.shape_cast %39 : vector<1x32x1xf32> to vector<32x1xf32>
    %41 = vector.extract_strided_slice %0 {offsets = [5, 0], sizes = [1, 16], strides = [1, 1]} : vector<6x16xf32> to vector<1x16xf32>
    %42 = vector.broadcast %40 : vector<32x1xf32> to vector<32x16xf32>
    %43 = vector.broadcast %41 : vector<1x16xf32> to vector<32x16xf32>
    %44 = arith.mulf %42, %43 : vector<32x16xf32>
    %45 = arith.addf %38, %44 : vector<32x16xf32>
    %cst = arith.constant 0.000000e+00 : f32
    %46 = vector.broadcast %cst : f32 to vector<32x16xf32>
    %47 = arith.maximumf %45, %46 : vector<32x16xf32>
    %c0_16 = arith.constant 0 : index
    %c0_17 = arith.constant 0 : index
    %48 = vector.load %arg4[%c0_16, %c0_17] : memref<64x32xbf16, #tpu.memory_space<vmem>>, vector<64x32xbf16>
    %49 = arith.truncf %47 : vector<32x16xf32> to vector<32x16xbf16>
    %cst_18 = arith.constant dense<0.000000e+00> : vector<64x16xf32>
    %50 = tpu.matmul %48, %49, %cst_18 {dimension_numbers = #tpu.dot_dimension_numbers<[1], [0], [0], [1], [0, 0, 1, 1], [], []>} : vector<64x32xbf16>, vector<32x16xbf16>, vector<64x16xf32> -> vector<64x16xf32>
    %c0_19 = arith.constant 0 : index
    %c0_20 = arith.constant 0 : index
    %51 = vector.load %arg5[%c0_19, %c0_20] : memref<64x1xf32, #tpu.memory_space<vmem>>, vector<64x1xf32>
    %52 = vector.broadcast %51 : vector<64x1xf32> to vector<64x16xf32>
    %53 = arith.addf %50, %52 : vector<64x16xf32>
    %cst_21 = arith.constant 0.000000e+00 : f32
    %54 = vector.broadcast %cst_21 : f32 to vector<64x16xf32>
    %55 = arith.maximumf %53, %54 : vector<64x16xf32>
    %c0_22 = arith.constant 0 : index
    %c0_23 = arith.constant 0 : index
    %56 = vector.load %arg6[%c0_22, %c0_23] : memref<32x64xbf16, #tpu.memory_space<vmem>>, vector<32x64xbf16>
    %57 = arith.truncf %55 : vector<64x16xf32> to vector<64x16xbf16>
    %cst_24 = arith.constant dense<0.000000e+00> : vector<32x16xf32>
    %58 = tpu.matmul %56, %57, %cst_24 {dimension_numbers = #tpu.dot_dimension_numbers<[1], [0], [0], [1], [0, 0, 1, 1], [], []>} : vector<32x64xbf16>, vector<64x16xbf16>, vector<32x16xf32> -> vector<32x16xf32>
    %c0_25 = arith.constant 0 : index
    %c0_26 = arith.constant 0 : index
    %59 = vector.load %arg7[%c0_25, %c0_26] : memref<32x1xf32, #tpu.memory_space<vmem>>, vector<32x1xf32>
    %60 = vector.broadcast %59 : vector<32x1xf32> to vector<32x16xf32>
    %61 = arith.addf %58, %60 : vector<32x16xf32>
    %cst_27 = arith.constant 0.000000e+00 : f32
    %62 = vector.broadcast %cst_27 : f32 to vector<32x16xf32>
    %63 = arith.maximumf %61, %62 : vector<32x16xf32>
    %c0_28 = arith.constant 0 : index
    %c0_29 = arith.constant 0 : index
    %64 = vector.load %arg8[%c0_28, %c0_29] : memref<22x32xbf16, #tpu.memory_space<vmem>>, vector<22x32xbf16>
    %65 = arith.truncf %63 : vector<32x16xf32> to vector<32x16xbf16>
    %cst_30 = arith.constant dense<0.000000e+00> : vector<22x16xf32>
    %66 = tpu.matmul %64, %65, %cst_30 {dimension_numbers = #tpu.dot_dimension_numbers<[1], [0], [0], [1], [0, 0, 1, 1], [], []>} : vector<22x32xbf16>, vector<32x16xbf16>, vector<22x16xf32> -> vector<22x16xf32>
    %c0_31 = arith.constant 0 : index
    %c0_32 = arith.constant 0 : index
    %67 = vector.load %arg9[%c0_31, %c0_32] : memref<22x1xf32, #tpu.memory_space<vmem>>, vector<22x1xf32>
    %68 = vector.broadcast %67 : vector<22x1xf32> to vector<22x16xf32>
    %69 = arith.addf %66, %68 : vector<22x16xf32>
    %c0_33 = arith.constant 0 : index
    %c0_34 = arith.constant 0 : index
    %70 = vector.load %arg10[%c0_33, %c0_34] : memref<22x16xf32, #tpu.memory_space<vmem>>, vector<22x16xf32>
    tpu.vector_store %arg10[%c0_33, %c0_34], %69 {strides = array<i32>} : memref<22x16xf32, #tpu.memory_space<vmem>>, vector<22x16xf32>,
    return
  }
  func.func @transform_0(%arg0: i32) -> (i32, i32) {
    %c0_i32 = arith.constant 0 : i32
    %c0_i32_0 = arith.constant 0 : i32
    return %c0_i32, %arg0 : i32, i32
  }
  func.func @transform_1(%arg0: i32) -> (i32, i32, i32) {
    %c0_i32 = arith.constant 0 : i32
    %c0_i32_0 = arith.constant 0 : i32
    %c0_i32_1 = arith.constant 0 : i32
    %c0_i32_2 = arith.constant 0 : i32
    return %c0_i32, %c0_i32_0, %c0_i32_1 : i32, i32, i32
  }
  func.func @transform_2(%arg0: i32) -> (i32, i32) {
    %c0_i32 = arith.constant 0 : i32
    %c0_i32_0 = arith.constant 0 : i32
    %c0_i32_1 = arith.constant 0 : i32
    return %c0_i32, %c0_i32_0 : i32, i32
  }
  func.func @transform_3(%arg0: i32) -> (i32, i32) {
    %c0_i32 = arith.constant 0 : i32
    %c0_i32_0 = arith.constant 0 : i32
    %c0_i32_1 = arith.constant 0 : i32
    return %c0_i32, %c0_i32_0 : i32, i32
  }
  func.func @transform_4(%arg0: i32) -> (i32, i32) {
    %c0_i32 = arith.constant 0 : i32
    %c0_i32_0 = arith.constant 0 : i32
    %c0_i32_1 = arith.constant 0 : i32
    return %c0_i32, %c0_i32_0 : i32, i32
  }
  func.func @transform_5(%arg0: i32) -> (i32, i32) {
    %c0_i32 = arith.constant 0 : i32
    %c0_i32_0 = arith.constant 0 : i32
    %c0_i32_1 = arith.constant 0 : i32
    return %c0_i32, %c0_i32_0 : i32, i32
  }
  func.func @transform_6(%arg0: i32) -> (i32, i32) {
    %c0_i32 = arith.constant 0 : i32
    %c0_i32_0 = arith.constant 0 : i32
    %c0_i32_1 = arith.constant 0 : i32
    return %c0_i32, %c0_i32_0 : i32, i32
  }
  func.func @transform_7(%arg0: i32) -> (i32, i32) {
    %c0_i32 = arith.constant 0 : i32
    %c0_i32_0 = arith.constant 0 : i32
    %c0_i32_1 = arith.constant 0 : i32
    return %c0_i32, %c0_i32_0 : i32, i32
  }
  func.func @transform_8(%arg0: i32) -> (i32, i32) {
    %c0_i32 = arith.constant 0 : i32
    %c0_i32_0 = arith.constant 0 : i32
    %c0_i32_1 = arith.constant 0 : i32
    return %c0_i32, %c0_i32_0 : i32, i32
  }
  func.func @transform_9(%arg0: i32) -> (i32, i32) {
    %c0_i32 = arith.constant 0 : i32
    %c0_i32_0 = arith.constant 0 : i32
    return %c0_i32, %arg0 : i32, i32
  }
}

</mosaic_0001>

<llo_original>
// kernel: tpu_custom_call.1
$region0: #{tpu_custom_call.1}
  #allocation0 [shape = 'u32[]', space=smem, size = 0x4, offset = 0x4, fixed_abs, tag = 'smem constant byte address 0x4 - core index']
  #allocation1 [shape = 'u32[72,128]{1,0:T(1,128)}', space=vmem, size = 0x9000, scoped, tag = 'internal scratch']
  %s0 = inlined_call_operand.vmem [shape: f32[6,16], index: 0, kind: input, shape index: {}]
  %s1 = inlined_call_operand.vmem [shape: f32[6,32,1], index: 1, kind: input, shape index: {}]
  %s2 = inlined_call_operand.vmem [shape: f32[32,1], index: 2, kind: input, shape index: {}]
  %s3 = inlined_call_operand.vmem [shape: bf16[64,32], index: 3, kind: input, shape index: {}]
  %s4 = inlined_call_operand.vmem [shape: f32[64,1], index: 4, kind: input, shape index: {}]
  %s5 = inlined_call_operand.vmem [shape: bf16[32,64], index: 5, kind: input, shape index: {}]
  %s6 = inlined_call_operand.vmem [shape: f32[32,1], index: 6, kind: input, shape index: {}]
  %s7 = inlined_call_operand.vmem [shape: bf16[22,32], index: 7, kind: input, shape index: {}]
  %s8 = inlined_call_operand.vmem [shape: f32[22,1], index: 8, kind: input, shape index: {}]
  %s9 = inlined_call_operand.vmem [shape: f32[22,16], index: 9, kind: output, shape index: {}]
  %s10 = sld [smem:[#allocation0]]
  $region46: #{tpu_custom_call.1} parent=0
    _
  %s12 = ssub.s32 1, %s10
  %s13 = scalar_select 0, %s12, %s10
  // Predicated region
  $region2: #{tpu_custom_call.1} parent=0 // pred_check
    _
  $region3: #{tpu_custom_call.1} parent=0 // pred_check_branch
    %15 = sbr.rel (0) target = $region5
  $region4: #{tpu_custom_call.1} parent=0 // pred_region
    _
  $region5: #{tpu_custom_call.1} parent=0 // pred_fallthru
    _
  // Predicated region
  $region6: #{tpu_custom_call.1} parent=0 // pred_check
    _
  $region7: #{tpu_custom_call.1} parent=0 // pred_check_branch
    %17 = sbr.rel (0) target = $region9
  $region8: #{tpu_custom_call.1} parent=0 // pred_region
    _
  $region9: #{tpu_custom_call.1} parent=0 // pred_fallthru
    _
  // Predicated region
  $region10: #{tpu_custom_call.1} parent=0 // pred_check
    _
  $region11: #{tpu_custom_call.1} parent=0 // pred_check_branch
    %19 = sbr.rel (0) target = $region13
  $region12: #{tpu_custom_call.1} parent=0 // pred_region
    _
  $region13: #{tpu_custom_call.1} parent=0 // pred_fallthru
    _
  // Predicated region
  $region14: #{tpu_custom_call.1} parent=0 // pred_check
    _
  $region15: #{tpu_custom_call.1} parent=0 // pred_check_branch
    %21 = sbr.rel (0) target = $region17
  $region16: #{tpu_custom_call.1} parent=0 // pred_region
    _
  $region17: #{tpu_custom_call.1} parent=0 // pred_fallthru
    _
  // Predicated region
  $region18: #{tpu_custom_call.1} parent=0 // pred_check
    _
  $region19: #{tpu_custom_call.1} parent=0 // pred_check_branch
    %23 = sbr.rel (0) target = $region21
  $region20: #{tpu_custom_call.1} parent=0 // pred_region
    _
  $region21: #{tpu_custom_call.1} parent=0 // pred_fallthru
    _
  // Predicated region
  $region22: #{tpu_custom_call.1} parent=0 // pred_check
    _
  $region23: #{tpu_custom_call.1} parent=0 // pred_check_branch
    %25 = sbr.rel (0) target = $region25
  $region24: #{tpu_custom_call.1} parent=0 // pred_region
    _
  $region25: #{tpu_custom_call.1} parent=0 // pred_fallthru
    _
  // Predicated region
  $region26: #{tpu_custom_call.1} parent=0 // pred_check
    _
  $region27: #{tpu_custom_call.1} parent=0 // pred_check_branch
    %27 = sbr.rel (0) target = $region29
  $region28: #{tpu_custom_call.1} parent=0 // pred_region
    _
  $region29: #{tpu_custom_call.1} parent=0 // pred_fallthru
    _
  // Predicated region
  $region30: #{tpu_custom_call.1} parent=0 // pred_check
    _
  $region31: #{tpu_custom_call.1} parent=0 // pred_check_branch
    %29 = sbr.rel (0) target = $region33
  $region32: #{tpu_custom_call.1} parent=0 // pred_region
    _
  $region33: #{tpu_custom_call.1} parent=0 // pred_fallthru
    _
  // Predicated region
  $region34: #{tpu_custom_call.1} parent=0 // pred_check
    _
  $region35: #{tpu_custom_call.1} parent=0 // pred_check_branch
    %31 = sbr.rel (0) target = $region37
  $region36: #{tpu_custom_call.1} parent=0 // pred_region
    _
  $region37: #{tpu_custom_call.1} parent=0 // pred_fallthru
    _
  %v33 = vld [vmem:[%s0] sm:$0x3f]
  %v34 = vld [vmem:[%s2] sm:$0xff]
  %v35 = vld [vmem:[%s2 + $0x8] sm:$0xff]
  %v36 = vld [vmem:[%s2 + $0x10] sm:$0xff]
  %v37 = vld [vmem:[%s2 + $0x18] sm:$0xff]
  %39 = vset.pattern.permute.xlu0 0
  %40 = vperm.xlu0 %39, %v34
  %v41 = vpop.permute.xlu0 %40
  %44 = vset.pattern.permute.xlu0 0
  %45 = vperm.xlu0 %44, %v35
  %v46 = vpop.permute.xlu0 %45
  %49 = vset.pattern.permute.xlu0 0
  %50 = vperm.xlu0 %49, %v36
  %v51 = vpop.permute.xlu0 %50
  %54 = vset.pattern.permute.xlu0 0
  %55 = vperm.xlu0 %54, %v37
  %v56 = vpop.permute.xlu0 %55
  %v58 = vld [vmem:[%s1] sm:$0xff]
  %v59 = vld [vmem:[%s1 + $0x8] sm:$0xff]
  %v60 = vld [vmem:[%s1 + $0x10] sm:$0xff]
  %v61 = vld [vmem:[%s1 + $0x18] sm:$0xff]
  %63 = vset.pattern.permute.xlu0 0
  %64 = vperm.xlu0 %63, %v58
  %v65 = vpop.permute.xlu0 %64
  %68 = vset.pattern.permute.xlu0 0
  %69 = vperm.xlu0 %68, %v59
  %v70 = vpop.permute.xlu0 %69
  %73 = vset.pattern.permute.xlu0 0
  %74 = vperm.xlu0 %73, %v60
  %v75 = vpop.permute.xlu0 %74
  %78 = vset.pattern.permute.xlu0 0
  %79 = vperm.xlu0 %78, %v61
  %v80 = vpop.permute.xlu0 %79
  %v82 = vperm.slane %v33, 0
  %v83 = vmul.f32 %v65, %v82
  %v84 = vmul.f32 %v70, %v82
  %v85 = vmul.f32 %v75, %v82
  %v86 = vmul.f32 %v80, %v82
  %v87 = vadd.f32 %v41, %v83
  %v88 = vadd.f32 %v46, %v84
  %v89 = vadd.f32 %v51, %v85
  %v90 = vadd.f32 %v56, %v86
  %s91 = scalar_lea.vmem %s1, 32
  %v92 = vld [vmem:[%s91] sm:$0xff]
  %v93 = vld [vmem:[%s91 + $0x8] sm:$0xff]
  %v94 = vld [vmem:[%s91 + $0x10] sm:$0xff]
  %v95 = vld [vmem:[%s91 + $0x18] sm:$0xff]
  %97 = vset.pattern.permute.xlu0 0
  %98 = vperm.xlu0 %97, %v92
  %v99 = vpop.permute.xlu0 %98
  %102 = vset.pattern.permute.xlu0 0
  %103 = vperm.xlu0 %102, %v93
  %v104 = vpop.permute.xlu0 %103
  %107 = vset.pattern.permute.xlu0 0
  %108 = vperm.xlu0 %107, %v94
  %v109 = vpop.permute.xlu0 %108
  %112 = vset.pattern.permute.xlu0 0
  %113 = vperm.xlu0 %112, %v95
  %v114 = vpop.permute.xlu0 %113
  %v116 = vperm.slane %v33, 1
  %v117 = vmul.f32 %v99, %v116
  %v118 = vmul.f32 %v104, %v116
  %v119 = vmul.f32 %v109, %v116
  %v120 = vmul.f32 %v114, %v116
  %v121 = vadd.f32 %v87, %v117
  %v122 = vadd.f32 %v88, %v118
  %v123 = vadd.f32 %v89, %v119
  %v124 = vadd.f32 %v90, %v120
  %s125 = scalar_lea.vmem %s1, 64
  %v126 = vld [vmem:[%s125] sm:$0xff]
  %v127 = vld [vmem:[%s125 + $0x8] sm:$0xff]
  %v128 = vld [vmem:[%s125 + $0x10] sm:$0xff]
  %v129 = vld [vmem:[%s125 + $0x18] sm:$0xff]
  %131 = vset.pattern.permute.xlu0 0
  %132 = vperm.xlu0 %131, %v126
  %v133 = vpop.permute.xlu0 %132
  %136 = vset.pattern.permute.xlu0 0
  %137 = vperm.xlu0 %136, %v127
  %v138 = vpop.permute.xlu0 %137
  %141 = vset.pattern.permute.xlu0 0
  %142 = vperm.xlu0 %141, %v128
  %v143 = vpop.permute.xlu0 %142
  %146 = vset.pattern.permute.xlu0 0
  %147 = vperm.xlu0 %146, %v129
  %v148 = vpop.permute.xlu0 %147
  %v150 = vperm.slane %v33, 2
  %v151 = vmul.f32 %v133, %v150
  %v152 = vmul.f32 %v138, %v150
  %v153 = vmul.f32 %v143, %v150
  %v154 = vmul.f32 %v148, %v150
  %v155 = vadd.f32 %v121, %v151
  %v156 = vadd.f32 %v122, %v152
  %v157 = vadd.f32 %v123, %v153
  %v158 = vadd.f32 %v124, %v154
  %s159 = scalar_lea.vmem %s1, 96
  %v160 = vld [vmem:[%s159] sm:$0xff]
  %v161 = vld [vmem:[%s159 + $0x8] sm:$0xff]
  %v162 = vld [vmem:[%s159 + $0x10] sm:$0xff]
  %v163 = vld [vmem:[%s159 + $0x18] sm:$0xff]
  %165 = vset.pattern.permute.xlu0 0
  %166 = vperm.xlu0 %165, %v160
  %v167 = vpop.permute.xlu0 %166
  %170 = vset.pattern.permute.xlu0 0
  %171 = vperm.xlu0 %170, %v161
  %v172 = vpop.permute.xlu0 %171
  %175 = vset.pattern.permute.xlu0 0
  %176 = vperm.xlu0 %175, %v162
  %v177 = vpop.permute.xlu0 %176
  %180 = vset.pattern.permute.xlu0 0
  %181 = vperm.xlu0 %180, %v163
  %v182 = vpop.permute.xlu0 %181
  %v184 = vperm.slane %v33, 3
  %v185 = vmul.f32 %v167, %v184
  %v186 = vmul.f32 %v172, %v184
  %v187 = vmul.f32 %v177, %v184
  %v188 = vmul.f32 %v182, %v184
  %v189 = vadd.f32 %v155, %v185
  %v190 = vadd.f32 %v156, %v186
  %v191 = vadd.f32 %v157, %v187
  %v192 = vadd.f32 %v158, %v188
  %s193 = scalar_lea.vmem %s1, 128
  %v194 = vld [vmem:[%s193] sm:$0xff]
  %v195 = vld [vmem:[%s193 + $0x8] sm:$0xff]
  %v196 = vld [vmem:[%s193 + $0x10] sm:$0xff]
  %v197 = vld [vmem:[%s193 + $0x18] sm:$0xff]
  %199 = vset.pattern.permute.xlu0 0
  %200 = vperm.xlu0 %199, %v194
  %v201 = vpop.permute.xlu0 %200
  %204 = vset.pattern.permute.xlu0 0
  %205 = vperm.xlu0 %204, %v195
  %v206 = vpop.permute.xlu0 %205
  %209 = vset.pattern.permute.xlu0 0
  %210 = vperm.xlu0 %209, %v196
  %v211 = vpop.permute.xlu0 %210
  %214 = vset.pattern.permute.xlu0 0
  %215 = vperm.xlu0 %214, %v197
  %v216 = vpop.permute.xlu0 %215
  %v218 = vperm.slane %v33, 4
  %v219 = vmul.f32 %v201, %v218
  %v220 = vmul.f32 %v206, %v218
  %v221 = vmul.f32 %v211, %v218
  %v222 = vmul.f32 %v216, %v218
  %v223 = vadd.f32 %v189, %v219
  %v224 = vadd.f32 %v190, %v220
  %v225 = vadd.f32 %v191, %v221
  %v226 = vadd.f32 %v192, %v222
  %s227 = scalar_lea.vmem %s1, 160
  %v228 = vld [vmem:[%s227] sm:$0xff]
  %v229 = vld [vmem:[%s227 + $0x8] sm:$0xff]
  %v230 = vld [vmem:[%s227 + $0x10] sm:$0xff]
  %v231 = vld [vmem:[%s227 + $0x18] sm:$0xff]
  %233 = vset.pattern.permute.xlu0 0
  %234 = vperm.xlu0 %233, %v228
  %v235 = vpop.permute.xlu0 %234
  %238 = vset.pattern.permute.xlu0 0
  %239 = vperm.xlu0 %238, %v229
  %v240 = vpop.permute.xlu0 %239
  %243 = vset.pattern.permute.xlu0 0
  %244 = vperm.xlu0 %243, %v230
  %v245 = vpop.permute.xlu0 %244
  %248 = vset.pattern.permute.xlu0 0
  %249 = vperm.xlu0 %248, %v231
  %v250 = vpop.permute.xlu0 %249
  %v252 = vperm.slane %v33, 5
  %v253 = vmul.f32 %v235, %v252
  %v254 = vmul.f32 %v240, %v252
  %v255 = vmul.f32 %v245, %v252
  %v256 = vmul.f32 %v250, %v252
  %v257 = vadd.f32 %v223, %v253
  %v258 = vadd.f32 %v224, %v254
  %v259 = vadd.f32 %v225, %v255
  %v260 = vadd.f32 %v226, %v256
  %v261 = vmax.f32 %v257, 0.0
  %v262 = vmax.f32 %v258, 0.0
  %v263 = vmax.f32 %v259, 0.0
  %v264 = vmax.f32 %v260, 0.0
  %v265 = vld [vmem:[%s3] sm:$0xf]
  %v266 = vld [vmem:[%s3 + $0x4] sm:$0xf]
  %v267 = vld [vmem:[%s3 + $0x8] sm:$0xf]
  %v268 = vld [vmem:[%s3 + $0xc] sm:$0xf]
  %v269 = vld [vmem:[%s3 + $0x10] sm:$0xf]
  %v270 = vld [vmem:[%s3 + $0x14] sm:$0xf]
  %v271 = vld [vmem:[%s3 + $0x18] sm:$0xf]
  %v272 = vld [vmem:[%s3 + $0x1c] sm:$0xf]
  %v273 = vpack.c.bf16 %v262, %v261
  %v274 = vpack.c.bf16 %v264, %v263
  %v275 = vld [vmem:[%s4] sm:$0xff]
  %v276 = vld [vmem:[%s4 + $0x8] sm:$0xff]
  %v277 = vld [vmem:[%s4 + $0x10] sm:$0xff]
  %v278 = vld [vmem:[%s4 + $0x18] sm:$0xff]
  %v279 = vld [vmem:[%s4 + $0x20] sm:$0xff]
  %v280 = vld [vmem:[%s4 + $0x28] sm:$0xff]
  %v281 = vld [vmem:[%s4 + $0x30] sm:$0xff]
  %v282 = vld [vmem:[%s4 + $0x38] sm:$0xff]
  %284 = vset.pattern.permute.xlu0 0
  %285 = vperm.xlu0 %284, %v275
  %v286 = vpop.permute.xlu0 %285
  %289 = vset.pattern.permute.xlu0 0
  %290 = vperm.xlu0 %289, %v276
  %v291 = vpop.permute.xlu0 %290
  %294 = vset.pattern.permute.xlu0 0
  %295 = vperm.xlu0 %294, %v277
  %v296 = vpop.permute.xlu0 %295
  %299 = vset.pattern.permute.xlu0 0
  %300 = vperm.xlu0 %299, %v278
  %v301 = vpop.permute.xlu0 %300
  %304 = vset.pattern.permute.xlu0 0
  %305 = vperm.xlu0 %304, %v279
  %v306 = vpop.permute.xlu0 %305
  %309 = vset.pattern.permute.xlu0 0
  %310 = vperm.xlu0 %309, %v280
  %v311 = vpop.permute.xlu0 %310
  %314 = vset.pattern.permute.xlu0 0
  %315 = vperm.xlu0 %314, %v281
  %v316 = vpop.permute.xlu0 %315
  %319 = vset.pattern.permute.xlu0 0
  %320 = vperm.xlu0 %319, %v282
  %v321 = vpop.permute.xlu0 %320
  %v331 = vunpack.c.l.b16 %v265
  %v332 = vunpack.c.l.b16 %v266
  %v333 = vunpack.c.l.b16 %v267
  %v334 = vunpack.c.l.b16 %v268
  %v335 = vunpack.c.l.b16 %v269
  %v336 = vunpack.c.l.b16 %v270
  %v337 = vunpack.c.l.b16 %v271
  %v338 = vunpack.c.l.b16 %v272
  %v339 = vpack.c.b16 %v332, %v331
  %v340 = vpack.c.b16 %v334, %v333
  %v341 = vpack.c.b16 %v336, %v335
  %v342 = vpack.c.b16 %v338, %v337
  %vm343 = vcmask 261120
  %v345 = vsel %vm343, %v339, 0
  %v348 = vsel %vm343, %v340, 0
  %v351 = vsel %vm343, %v341, 0
  %v354 = vsel %vm343, %v342, 0
  %356 = vmatpush.bf16.msra.mxu0 0
  %357 = vmatpush.bf16.msra.mxu0 0
  %358 = vmatpush.bf16.msra.mxu0 0
  %359 = vmatpush.bf16.msra.mxu0 0
  %360 = vmatpush.bf16.msra.mxu0 0
  %361 = vmatpush.bf16.msra.mxu0 0
  %362 = vmatpush.bf16.msra.mxu0 %v274
  %363 = vmatpush.bf16.msra.mxu0 %v273
  %364 = vmatmul.bf16.gmra.mxu0 %v345
  %v365 = vpop.f32.mrf.mxu0
  %v366 = vadd.f32 %v286, %v365
  %v367 = vpop.f32.mrf.mxu0
  %v368 = vadd.f32 %v291, %v367
  %369 = vmatmul.bf16.gmra.mxu0 %v348
  %v370 = vpop.f32.mrf.mxu0
  %v371 = vadd.f32 %v296, %v370
  %v372 = vpop.f32.mrf.mxu0
  %v373 = vadd.f32 %v301, %v372
  %374 = vmatmul.bf16.gmra.mxu0 %v351
  %v375 = vpop.f32.mrf.mxu0
  %v376 = vadd.f32 %v306, %v375
  %v377 = vpop.f32.mrf.mxu0
  %v378 = vadd.f32 %v311, %v377
  %379 = vmatmul.bf16.gmra.mxu0 %v354
  %v380 = vpop.f32.mrf.mxu0
  %v381 = vadd.f32 %v316, %v380
  %v382 = vpop.f32.mrf.mxu0
  %v383 = vadd.f32 %v321, %v382
  %384 = vdwg.mxu0
  %v385 = vmax.f32 %v366, 0.0
  %v386 = vmax.f32 %v368, 0.0
  %v387 = vmax.f32 %v371, 0.0
  %v388 = vmax.f32 %v373, 0.0
  %v389 = vmax.f32 %v376, 0.0
  %v390 = vmax.f32 %v378, 0.0
  %v391 = vmax.f32 %v381, 0.0
  %v392 = vmax.f32 %v383, 0.0
  %v393 = vld [vmem:[%s5] sm:$0xf]
  %v394 = vld [vmem:[%s5 + $0x4] sm:$0xf]
  %v395 = vld [vmem:[%s5 + $0x8] sm:$0xf]
  %v396 = vld [vmem:[%s5 + $0xc] sm:$0xf]
  %v397 = vpack.c.bf16 %v386, %v385
  %v398 = vpack.c.bf16 %v388, %v387
  %v399 = vpack.c.bf16 %v390, %v389
  %v400 = vpack.c.bf16 %v392, %v391
  %v401 = vld [vmem:[%s6] sm:$0xff]
  %v402 = vld [vmem:[%s6 + $0x8] sm:$0xff]
  %v403 = vld [vmem:[%s6 + $0x10] sm:$0xff]
  %v404 = vld [vmem:[%s6 + $0x18] sm:$0xff]
  %406 = vset.pattern.permute.xlu0 0
  %407 = vperm.xlu0 %406, %v401
  %v408 = vpop.permute.xlu0 %407
  %411 = vset.pattern.permute.xlu0 0
  %412 = vperm.xlu0 %411, %v402
  %v413 = vpop.permute.xlu0 %412
  %416 = vset.pattern.permute.xlu0 0
  %417 = vperm.xlu0 %416, %v403
  %v418 = vpop.permute.xlu0 %417
  %421 = vset.pattern.permute.xlu0 0
  %422 = vperm.xlu0 %421, %v404
  %v423 = vpop.permute.xlu0 %422
  %v429 = vunpack.c.l.b16 %v393
  %v430 = vunpack.c.l.b16 %v394
  %v431 = vunpack.c.l.b16 %v395
  %v432 = vunpack.c.l.b16 %v396
  %v433 = vpack.c.b16 %v430, %v429
  %v434 = vpack.c.b16 %v432, %v431
  %vm435 = vcmask 523264
  %v437 = vsel %vm435, %v433, 0
  %v440 = vsel %vm435, %v434, 0
  %442 = vmatpush.bf16.msra.mxu0 0
  %443 = vmatpush.bf16.msra.mxu0 0
  %444 = vmatpush.bf16.msra.mxu0 0
  %445 = vmatpush.bf16.msra.mxu0 0
  %446 = vmatpush.bf16.msra.mxu0 %v400
  %447 = vmatpush.bf16.msra.mxu0 %v399
  %448 = vmatpush.bf16.msra.mxu0 %v398
  %449 = vmatpush.bf16.msra.mxu0 %v397
  %450 = vmatmul.bf16.gmra.mxu0 %v437
  %v451 = vpop.f32.mrf.mxu0
  %v452 = vadd.f32 %v408, %v451
  %v453 = vpop.f32.mrf.mxu0
  %v454 = vadd.f32 %v413, %v453
  %455 = vmatmul.bf16.gmra.mxu0 %v440
  %v456 = vpop.f32.mrf.mxu0
  %v457 = vadd.f32 %v418, %v456
  %v458 = vpop.f32.mrf.mxu0
  %v459 = vadd.f32 %v423, %v458
  %460 = vdwg.mxu0
  %v461 = vmax.f32 %v452, 0.0
  %v462 = vmax.f32 %v454, 0.0
  %v463 = vmax.f32 %v457, 0.0
  %v464 = vmax.f32 %v459, 0.0
  %v465 = vld [vmem:[%s7] sm:$0xf]
  %v466 = vld [vmem:[%s7 + $0x4] sm:$0xf]
  %v467 = vld [vmem:[%s7 + $0x8] sm:$0x7]
  %v468 = vpack.c.bf16 %v462, %v461
  %v469 = vpack.c.bf16 %v464, %v463
  %v470 = vld [vmem:[%s8] sm:$0xff]
  %v471 = vld [vmem:[%s8 + $0x8] sm:$0xff]
  %v472 = vld [vmem:[%s8 + $0x10] sm:$0x3f]
  %474 = vset.pattern.permute.xlu0 0
  %475 = vperm.xlu0 %474, %v470
  %v476 = vpop.permute.xlu0 %475
  %479 = vset.pattern.permute.xlu0 0
  %480 = vperm.xlu0 %479, %v471
  %v481 = vpop.permute.xlu0 %480
  %484 = vset.pattern.permute.xlu0 0
  %485 = vperm.xlu0 %484, %v472
  %v486 = vpop.permute.xlu0 %485
  %v491 = vunpack.c.l.b16 %v465
  %v492 = vunpack.c.l.b16 %v466
  %v493 = vunpack.c.l.b16 %v467
  %v494 = vpack.c.b16 %v492, %v491
  %v495 = vpack.c.b16 %v493, %v493
  %v497 = vsel %vm343, %v494, 0
  %v500 = vsel %vm343, %v495, 0
  %502 = vmatpush.bf16.msra.mxu0 0
  %503 = vmatpush.bf16.msra.mxu0 0
  %504 = vmatpush.bf16.msra.mxu0 0
  %505 = vmatpush.bf16.msra.mxu0 0
  %506 = vmatpush.bf16.msra.mxu0 0
  %507 = vmatpush.bf16.msra.mxu0 0
  %508 = vmatpush.bf16.msra.mxu0 %v469
  %509 = vmatpush.bf16.msra.mxu0 %v468
  %510 = vmatmul.bf16.gmra.mxu0 %v497
  %v511 = vpop.f32.mrf.mxu0
  %v512 = vadd.f32 %v476, %v511
  %v513 = vpop.f32.mrf.mxu0
  %v514 = vadd.f32 %v481, %v513
  %515 = vmatmul.bf16.gmra.mxu0 %v500
  %v516 = vpop.f32.mrf.mxu0
  %v517 = vadd.f32 %v486, %v516
  %v518 = vpop.f32.mrf.mxu0
  %519 = vdwg.mxu0
  %vm520 = vcmask 130048
  %521 = vst.msk [vmem:[%s9] sm:$0xff] %vm520, %v512
  %522 = vst.msk [vmem:[%s9 + $0x8] sm:$0xff] %vm520, %v514
  %vm523 = vcmask 128000
  %524 = vst.msk [vmem:[%s9 + $0x10] sm:$0x3f] %vm523, %v517
  // Predicated region
  $region38: #{tpu_custom_call.1} parent=0 // pred_check
    _
  $region39: #{tpu_custom_call.1} parent=0 // pred_check_branch
    %526 = sbr.rel (0) target = $region41
  $region40: #{tpu_custom_call.1} parent=0 // pred_region
    _
  $region41: #{tpu_custom_call.1} parent=0 // pred_fallthru
    _
  // Predicated region
  $region42: #{tpu_custom_call.1} parent=0 // pred_check
    _
  $region43: #{tpu_custom_call.1} parent=0 // pred_check_branch
    %528 = sbr.rel (0) target = $region45
  $region44: #{tpu_custom_call.1} parent=0 // pred_region
    _
  $region45: #{tpu_custom_call.1} parent=0 // pred_fallthru
    _

</llo_original>
